<compile_context>
chip_gen: v6e
topology: v6e:2x2x1
jax: 0.10.0
libtpu: 0.0.40
codegen_flags: <defaults>
</compile_context>

<pallas_src>
from functools import partial
from math import ceil

import jax
import jax.numpy as jnp
from jax import lax
from jax.experimental import pallas as pl
from jax.experimental.pallas import tpu as pltpu

# ----------------------------- small test config ----------------------------
BATCH = 2
IN_CHANNELS = 16
OUT_CHANNELS = 32
KERNEL_SIZE = 8
SEQ_LEN = 16
UPSAMPLE = 2


# ------------------------------- helpers ------------------------------------
def _same_pad_meta(kernel_size, stride=1, dilation=1):
    """Mirror Conv1dSamePadding.__init__ (module only uses stride=1, dilation=1)."""
    cut_last = (kernel_size % 2 == 0) and (stride == 1) and (dilation % 2 == 1)
    padding = int(ceil((1 - stride + dilation * (kernel_size - 1)) / 2))
    return padding, cut_last


# ------------------------------ Pallas kernel --------------------------------
def _decoder_block_kernel(x_ref, w_ref, b_ref, out_ref, xpad_ref, xcol_ref, *,
                          kernel_size, pad, l_out, upsample):
    """Fused Conv1dSamePadding + bias + ReLU + nearest upsample.

      x_ref    : (B, Cin, L)          native NCL activation (whole batch)
      w_ref    : (K*Cin, Cout) bf16   im2col weight, tap-major / channel-minor
      b_ref    : (1, Cout)    f32     conv bias
      out_ref  : (B*l_out, c_pad) f32 lane-dense output block (c_pad % 128 == 0)
      xpad_ref : (B, L+2*pad, Cin)    VMEM scratch, zero-padded NLC activation
      xcol_ref : (B, l_out, K*Cin)    VMEM scratch, im2col matrix
    """
    B, Cin, L = x_ref.shape
    K = kernel_size
    Cout = w_ref.shape[1]
    c_pad = out_ref.shape[1]

    # NCL -> NLC transpose done once inside the kernel (XLU, stays in VMEM).
    x_nlc = jnp.transpose(x_ref[...], (0, 2, 1))

    # Zero only the 2*pad edge rows; the interior is written exactly once.
    if pad > 0:
        xpad_ref[:, :pad, :] = jnp.zeros((B, pad, Cin), xpad_ref.dtype)
        tail = xpad_ref.shape[1] - pad - L
        xpad_ref[:, pad + L:, :] = jnp.zeros((B, tail, Cin), xpad_ref.dtype)
    xpad_ref[:, pad:pad + L, :] = x_nlc

    # im2col: K lane-offset copies of the shifted sublane windows, built once.
    for k in range(K):
        xcol_ref[:, :, k * Cin:(k + 1) * Cin] = xpad_ref[:, k:k + l_out, :]

    # ONE MXU matmul, contraction = K*Cin, bf16 operands, f32 accumulation.
    x_col = xcol_ref[...].reshape(B * l_out, K * Cin).astype(jnp.bfloat16)
    acc = jnp.dot(x_col, w_ref[...], preferred_element_type=jnp.float32)

    # Bias + ReLU fused in-register (single VPU pass over the result).
    y = jnp.maximum(acc + b_ref[...], 0.0)                  # (B*l_out, Cout)

    # Nearest upsample = channel duplication along lanes.  Fill the full
    # lane-dense block (c_pad lanes, multiple of 128) with copies so the store
    # is one unmasked full-width store; the wrapper keeps the first
    # upsample*Cout lanes (copies 0..upsample-1), extras are sliced off.
    reps = -(-c_pad // Cout)                                 # ceil, reps >= upsample
    y_full = jnp.concatenate([y] * reps, axis=-1)
    if reps * Cout != c_pad:
        y_full = y_full[:, :c_pad]
    out_ref[...] = y_full.astype(out_ref.dtype)


# ------------------------------ public wrapper --------------------------------
def decoder_block(x_ncl, w, b, *, kernel_size, upsample=1):
    """DecoderBlock forward.

    x_ncl: (B, Cin, L) float32   w: (Cout, Cin, K)   b: (Cout,)
    returns (B, Cout, L * upsample) float32, matching the PyTorch module.
    """
    B, Cin, L = x_ncl.shape
    Cout = w.shape[0]
    assert w.shape == (Cout, Cin, kernel_size)
    pad, cut_last = _same_pad_meta(kernel_size)              # stride=1, dilation=1 only
    Lp = L + 2 * pad
    l_out = Lp - kernel_size + 1 - (1 if cut_last else 0)    # == L for "same" conv

    # Weight reshaped once to (K*Cin, Cout), tap-major / channel-minor to match
    # the kernel's im2col layout; bf16 for the MXU.
    w_col = jnp.transpose(w, (2, 1, 0)).reshape(kernel_size * Cin, Cout)
    w_col = w_col.astype(jnp.bfloat16)
    b2 = b.reshape(1, Cout).astype(jnp.float32)

    # Lane-dense output width (multiple of 128).
    c_valid = upsample * Cout
    c_pad = max(128, ((c_valid + 127) // 128) * 128)

    kernel = partial(_decoder_block_kernel, kernel_size=kernel_size, pad=pad,
                     l_out=l_out, upsample=upsample)

    out2d = pl.pallas_call(
        kernel,
        out_shape=jax.ShapeDtypeStruct((B * l_out, c_pad), jnp.float32),
        grid=(1,),                                # single step: whole batch at once
        in_specs=[
            pl.BlockSpec((B, Cin, L), lambda i: (0, 0, 0)),
            pl.BlockSpec((kernel_size * Cin, Cout), lambda i: (0, 0)),
            pl.BlockSpec((1, Cout), lambda i: (0, 0)),
        ],
        out_specs=pl.BlockSpec((B * l_out, c_pad), lambda i: (0, 0)),
        scratch_shapes=[
            pltpu.VMEM((B, Lp, Cin), jnp.float32),                       # xpad
            pltpu.VMEM((B, l_out, kernel_size * Cin), jnp.float32),      # im2col
        ],
        compiler_params=pltpu.CompilerParams(
            dimension_semantics=("arbitrary",)),  # don't shard a microscopic step
        cost_estimate=pl.CostEstimate(
            flops=2 * B * l_out * kernel_size * Cin * Cout,
            transcendentals=0,
            bytes_accessed=(B * Cin * L * 4 + kernel_size * Cin * Cout * 2
                            + Cout * 4 + B * l_out * c_pad * 4)),
    )(x_ncl, w_col, b2)

    # Keep the first upsample*Cout lanes, then a row-major identity reshape:
    # (B*l_out, upsample*Cout) -> (B, upsample*l_out, Cout).
    out_nlc = out2d[:, :c_valid].reshape(B, upsample * l_out, Cout)
    return jnp.transpose(out_nlc, (0, 2, 1))     # NLC -> NCL


# --------------------------- pure-JAX reference -------------------------------
def decoder_block_reference(x_ncl, w, b, *, kernel_size, upsample=1):
    pad, cut_last = _same_pad_meta(kernel_size)
    y = lax.conv_general_dilated(x_ncl, w, (1,), [(pad, pad)],
                                 dimension_numbers=("NCH", "OIH", "NCH"))
    y = y + b[None, :, None]
    if cut_last:
        y = y[:, :, :-1]
    y = jnp.maximum(y, 0.0)
    if upsample > 1:
        y = jnp.repeat(y, upsample, axis=-1)     # F.interpolate nearest
    return y


# --------------------------------- main ---------------------------------------
if __name__ == "__main__":
    key = jax.random.PRNGKey(0)
    kx, kw, kb, kw2 = jax.random.split(key, 4)
    x = jax.random.normal(kx, (BATCH, IN_CHANNELS, SEQ_LEN), jnp.float32)
    w = 0.1 * jax.random.normal(kw, (OUT_CHANNELS, IN_CHANNELS, KERNEL_SIZE),
                                jnp.float32)
    b = 0.1 * jax.random.normal(kb, (OUT_CHANNELS,), jnp.float32)

    # bf16 MXU operands -> compare against the f32 reference at bf16 tolerance.
    TOL = 5e-2

    # Main case: even kernel (cut_last_element=True) with upsample=2.
    fwd = jax.jit(partial(decoder_block, kernel_size=KERNEL_SIZE,
                          upsample=UPSAMPLE))
    out = jax.block_until_ready(fwd(x, w, b))
    assert out.shape == (BATCH, OUT_CHANNELS, SEQ_LEN * UPSAMPLE), out.shape
    assert bool(jnp.all(jnp.isfinite(out)))
    ref = jax.block_until_ready(
        decoder_block_reference(x, w, b, kernel_size=KERNEL_SIZE,
                                upsample=UPSAMPLE))
    max_err = float(jnp.max(jnp.abs(out - ref)))
    assert max_err < TOL, f"mismatch vs reference: {max_err}"

    # Secondary case: odd kernel (no cut), no upsample.
    w_odd = 0.1 * jax.random.normal(kw2, (OUT_CHANNELS, IN_CHANNELS, 3),
                                    jnp.float32)
    fwd2 = jax.jit(partial(decoder_block, kernel_size=3, upsample=1))
    out2 = jax.block_until_ready(fwd2(x, w_odd, b))
    ref2 = jax.block_until_ready(
        decoder_block_reference(x, w_odd, b, kernel_size=3, upsample=1))
    assert out2.shape == (BATCH, OUT_CHANNELS, SEQ_LEN), out2.shape
    max_err2 = float(jnp.max(jnp.abs(out2 - ref2)))
    assert max_err2 < TOL, f"mismatch vs reference (k=3): {max_err2}"

    print("KERNEL_OK")
</pallas_src>

<mosaic_0001>
module attributes {stable_mosaic.version = 11 : i64} {
  func.func @_decoder_block_kernel(%arg0: i32, %arg1: memref<2x16x16xf32, #tpu.memory_space<vmem>>, %arg2: memref<128x32xbf16, #tpu.memory_space<vmem>>, %arg3: memref<1x32xf32, #tpu.memory_space<vmem>>, %arg4: memref<32x128xf32, #tpu.memory_space<vmem>>, %arg5: memref<2x24x16xf32, #tpu.memory_space<vmem>>, %arg6: memref<2x16x128xf32, #tpu.memory_space<vmem>>) attributes {dimension_semantics = [#tpu.dimension_semantics<arbitrary>], iteration_bounds = array<i64: 1>, scalar_prefetch = 0 : i64, scratch_operands = 2 : i64, tpu.core_type = #tpu.core_type<tc>, window_params = [{pipeline_mode = #tpu.pipeline_mode<synchronous>, transform_indices = @transform_0, window_bounds = array<i64: 2, 16, 16>}, {pipeline_mode = #tpu.pipeline_mode<synchronous>, transform_indices = @transform_1, window_bounds = array<i64: 128, 32>}, {pipeline_mode = #tpu.pipeline_mode<synchronous>, transform_indices = @transform_2, window_bounds = array<i64: 1, 32>}, {pipeline_mode = #tpu.pipeline_mode<synchronous>, transform_indices = @transform_3, window_bounds = array<i64: 32, 128>}]} {
    %c0 = arith.constant 0 : index
    %c0_0 = arith.constant 0 : index
    %c0_1 = arith.constant 0 : index
    %0 = vector.load %arg1[%c0, %c0_0, %c0_1] : memref<2x16x16xf32, #tpu.memory_space<vmem>>, vector<2x16x16xf32>
    %1 = tpu.transpose %0, [0, 2, 1] : vector<2x16x16xf32> -> vector<2x16x16xf32>
    %cst = arith.constant 0.000000e+00 : f32
    %2 = vector.broadcast %cst : f32 to vector<2x4x16xf32>
    %c0_2 = arith.constant 0 : index
    %c0_3 = arith.constant 0 : index
    %c0_4 = arith.constant 0 : index
    %3 = vector.load %arg5[%c0_2, %c0_3, %c0_4] : memref<2x24x16xf32, #tpu.memory_space<vmem>>, vector<2x4x16xf32>
    tpu.vector_store %arg5[%c0_2, %c0_3, %c0_4], %2 {strides = array<i32>} : memref<2x24x16xf32, #tpu.memory_space<vmem>>, vector<2x4x16xf32>,
    %cst_5 = arith.constant 0.000000e+00 : f32
    %4 = vector.broadcast %cst_5 : f32 to vector<2x4x16xf32>
    %c0_6 = arith.constant 0 : index
    %c20 = arith.constant 20 : index
    %c0_7 = arith.constant 0 : index
    %5 = vector.load %arg5[%c0_6, %c20, %c0_7] : memref<2x24x16xf32, #tpu.memory_space<vmem>>, vector<2x4x16xf32>
    tpu.vector_store %arg5[%c0_6, %c20, %c0_7], %4 {strides = array<i32>} : memref<2x24x16xf32, #tpu.memory_space<vmem>>, vector<2x4x16xf32>,
    %c0_8 = arith.constant 0 : index
    %c4 = arith.constant 4 : index
    %c0_9 = arith.constant 0 : index
    %6 = vector.load %arg5[%c0_8, %c4, %c0_9] : memref<2x24x16xf32, #tpu.memory_space<vmem>>, vector<2x16x16xf32>
    tpu.vector_store %arg5[%c0_8, %c4, %c0_9], %1 {strides = array<i32>} : memref<2x24x16xf32, #tpu.memory_space<vmem>>, vector<2x16x16xf32>,
    %c0_10 = arith.constant 0 : index
    %c0_11 = arith.constant 0 : index
    %c0_12 = arith.constant 0 : index
    %7 = vector.load %arg5[%c0_10, %c0_11, %c0_12] : memref<2x24x16xf32, #tpu.memory_space<vmem>>, vector<2x16x16xf32>
    %c0_13 = arith.constant 0 : index
    %c0_14 = arith.constant 0 : index
    %c0_15 = arith.constant 0 : index
    %8 = vector.load %arg6[%c0_13, %c0_14, %c0_15] : memref<2x16x128xf32, #tpu.memory_space<vmem>>, vector<2x16x16xf32>
    tpu.vector_store %arg6[%c0_13, %c0_14, %c0_15], %7 {strides = array<i32>} : memref<2x16x128xf32, #tpu.memory_space<vmem>>, vector<2x16x16xf32>,
    %c0_16 = arith.constant 0 : index
    %c1 = arith.constant 1 : index
    %c0_17 = arith.constant 0 : index
    %9 = vector.load %arg5[%c0_16, %c1, %c0_17] : memref<2x24x16xf32, #tpu.memory_space<vmem>>, vector<2x16x16xf32>
    %c0_18 = arith.constant 0 : index
    %c0_19 = arith.constant 0 : index
    %c16 = arith.constant 16 : index
    %10 = vector.load %arg6[%c0_18, %c0_19, %c16] : memref<2x16x128xf32, #tpu.memory_space<vmem>>, vector<2x16x16xf32>
    tpu.vector_store %arg6[%c0_18, %c0_19, %c16], %9 {strides = array<i32>} : memref<2x16x128xf32, #tpu.memory_space<vmem>>, vector<2x16x16xf32>,
    %c0_20 = arith.constant 0 : index
    %c2 = arith.constant 2 : index
    %c0_21 = arith.constant 0 : index
    %11 = vector.load %arg5[%c0_20, %c2, %c0_21] : memref<2x24x16xf32, #tpu.memory_space<vmem>>, vector<2x16x16xf32>
    %c0_22 = arith.constant 0 : index
    %c0_23 = arith.constant 0 : index
    %c32 = arith.constant 32 : index
    %12 = vector.load %arg6[%c0_22, %c0_23, %c32] : memref<2x16x128xf32, #tpu.memory_space<vmem>>, vector<2x16x16xf32>
    tpu.vector_store %arg6[%c0_22, %c0_23, %c32], %11 {strides = array<i32>} : memref<2x16x128xf32, #tpu.memory_space<vmem>>, vector<2x16x16xf32>,
    %c0_24 = arith.constant 0 : index
    %c3 = arith.constant 3 : index
    %c0_25 = arith.constant 0 : index
    %13 = vector.load %arg5[%c0_24, %c3, %c0_25] : memref<2x24x16xf32, #tpu.memory_space<vmem>>, vector<2x16x16xf32>
    %c0_26 = arith.constant 0 : index
    %c0_27 = arith.constant 0 : index
    %c48 = arith.constant 48 : index
    %14 = vector.load %arg6[%c0_26, %c0_27, %c48] : memref<2x16x128xf32, #tpu.memory_space<vmem>>, vector<2x16x16xf32>
    tpu.vector_store %arg6[%c0_26, %c0_27, %c48], %13 {strides = array<i32>} : memref<2x16x128xf32, #tpu.memory_space<vmem>>, vector<2x16x16xf32>,
    %c0_28 = arith.constant 0 : index
    %c4_29 = arith.constant 4 : index
    %c0_30 = arith.constant 0 : index
    %15 = vector.load %arg5[%c0_28, %c4_29, %c0_30] : memref<2x24x16xf32, #tpu.memory_space<vmem>>, vector<2x16x16xf32>
    %c0_31 = arith.constant 0 : index
    %c0_32 = arith.constant 0 : index
    %c64 = arith.constant 64 : index
    %16 = vector.load %arg6[%c0_31, %c0_32, %c64] : memref<2x16x128xf32, #tpu.memory_space<vmem>>, vector<2x16x16xf32>
    tpu.vector_store %arg6[%c0_31, %c0_32, %c64], %15 {strides = array<i32>} : memref<2x16x128xf32, #tpu.memory_space<vmem>>, vector<2x16x16xf32>,
    %c0_33 = arith.constant 0 : index
    %c5 = arith.constant 5 : index
    %c0_34 = arith.constant 0 : index
    %17 = vector.load %arg5[%c0_33, %c5, %c0_34] : memref<2x24x16xf32, #tpu.memory_space<vmem>>, vector<2x16x16xf32>
    %c0_35 = arith.constant 0 : index
    %c0_36 = arith.constant 0 : index
    %c80 = arith.constant 80 : index
    %18 = vector.load %arg6[%c0_35, %c0_36, %c80] : memref<2x16x128xf32, #tpu.memory_space<vmem>>, vector<2x16x16xf32>
    tpu.vector_store %arg6[%c0_35, %c0_36, %c80], %17 {strides = array<i32>} : memref<2x16x128xf32, #tpu.memory_space<vmem>>, vector<2x16x16xf32>,
    %c0_37 = arith.constant 0 : index
    %c6 = arith.constant 6 : index
    %c0_38 = arith.constant 0 : index
    %19 = vector.load %arg5[%c0_37, %c6, %c0_38] : memref<2x24x16xf32, #tpu.memory_space<vmem>>, vector<2x16x16xf32>
    %c0_39 = arith.constant 0 : index
    %c0_40 = arith.constant 0 : index
    %c96 = arith.constant 96 : index
    %20 = vector.load %arg6[%c0_39, %c0_40, %c96] : memref<2x16x128xf32, #tpu.memory_space<vmem>>, vector<2x16x16xf32>
    tpu.vector_store %arg6[%c0_39, %c0_40, %c96], %19 {strides = array<i32>} : memref<2x16x128xf32, #tpu.memory_space<vmem>>, vector<2x16x16xf32>,
    %c0_41 = arith.constant 0 : index
    %c7 = arith.constant 7 : index
    %c0_42 = arith.constant 0 : index
    %21 = vector.load %arg5[%c0_41, %c7, %c0_42] : memref<2x24x16xf32, #tpu.memory_space<vmem>>, vector<2x16x16xf32>
    %c0_43 = arith.constant 0 : index
    %c0_44 = arith.constant 0 : index
    %c112 = arith.constant 112 : index
    %22 = vector.load %arg6[%c0_43, %c0_44, %c112] : memref<2x16x128xf32, #tpu.memory_space<vmem>>, vector<2x16x16xf32>
    tpu.vector_store %arg6[%c0_43, %c0_44, %c112], %21 {strides = array<i32>} : memref<2x16x128xf32, #tpu.memory_space<vmem>>, vector<2x16x16xf32>,
    %c0_45 = arith.constant 0 : index
    %c0_46 = arith.constant 0 : index
    %c0_47 = arith.constant 0 : index
    %23 = vector.load %arg6[%c0_45, %c0_46, %c0_47] : memref<2x16x128xf32, #tpu.memory_space<vmem>>, vector<2x16x128xf32>
    %24 = vector.shape_cast %23 : vector<2x16x128xf32> to vector<32x128xf32>
    %25 = arith.truncf %24 : vector<32x128xf32> to vector<32x128xbf16>
    %c0_48 = arith.constant 0 : index
    %c0_49 = arith.constant 0 : index
    %26 = vector.load %arg2[%c0_48, %c0_49] : memref<128x32xbf16, #tpu.memory_space<vmem>>, vector<128x32xbf16>
    %cst_50 = arith.constant dense<0.000000e+00> : vector<32x32xf32>
    %27 = tpu.matmul %25, %26, %cst_50 {dimension_numbers = #tpu.dot_dimension_numbers<[1], [0], [0], [1], [0, 0, 1, 1], [], []>} : vector<32x128xbf16>, vector<128x32xbf16>, vector<32x32xf32> -> vector<32x32xf32>
    %c0_51 = arith.constant 0 : index
    %c0_52 = arith.constant 0 : index
    %28 = vector.load %arg3[%c0_51, %c0_52] : memref<1x32xf32, #tpu.memory_space<vmem>>, vector<1x32xf32>
    %29 = vector.broadcast %28 : vector<1x32xf32> to vector<32x32xf32>
    %30 = arith.addf %27, %29 : vector<32x32xf32>
    %cst_53 = arith.constant 0.000000e+00 : f32
    %31 = vector.broadcast %cst_53 : f32 to vector<32x32xf32>
    %32 = arith.maximumf %30, %31 : vector<32x32xf32>
    %33 = tpu.concatenate %32, %32, %32, %32 in 1 : vector<32x32xf32>, vector<32x32xf32>, vector<32x32xf32>, vector<32x32xf32> -> vector<32x128xf32>
    %c0_54 = arith.constant 0 : index
    %c0_55 = arith.constant 0 : index
    %34 = vector.load %arg4[%c0_54, %c0_55] : memref<32x128xf32, #tpu.memory_space<vmem>>, vector<32x128xf32>
    tpu.vector_store %arg4[%c0_54, %c0_55], %33 {strides = array<i32>} : memref<32x128xf32, #tpu.memory_space<vmem>>, vector<32x128xf32>,
    return
  }
  func.func @transform_0(%arg0: i32) -> (i32, i32, i32) {
    %c0_i32 = arith.constant 0 : i32
    %c0_i32_0 = arith.constant 0 : i32
    %c0_i32_1 = arith.constant 0 : i32
    %c0_i32_2 = arith.constant 0 : i32
    return %c0_i32, %c0_i32_0, %c0_i32_1 : i32, i32, i32
  }
  func.func @transform_1(%arg0: i32) -> (i32, i32) {
    %c0_i32 = arith.constant 0 : i32
    %c0_i32_0 = arith.constant 0 : i32
    %c0_i32_1 = arith.constant 0 : i32
    return %c0_i32, %c0_i32_0 : i32, i32
  }
  func.func @transform_2(%arg0: i32) -> (i32, i32) {
    %c0_i32 = arith.constant 0 : i32
    %c0_i32_0 = arith.constant 0 : i32
    %c0_i32_1 = arith.constant 0 : i32
    return %c0_i32, %c0_i32_0 : i32, i32
  }
  func.func @transform_3(%arg0: i32) -> (i32, i32) {
    %c0_i32 = arith.constant 0 : i32
    %c0_i32_0 = arith.constant 0 : i32
    %c0_i32_1 = arith.constant 0 : i32
    return %c0_i32, %c0_i32_0 : i32, i32
  }
}

</mosaic_0001>

<llo_original>
// kernel: decoder_block.1
$region0: #{decoder_block.1}
  #allocation0 [shape = 'u32[]', space=smem, size = 0x4, offset = 0x4, fixed_abs, tag = 'smem constant byte address 0x4 - core index']
  #allocation1 [shape = 'u32[144,128]{1,0:T(1,128)}', space=vmem, size = 0x12000, scoped, tag = 'internal scratch']
  #allocation2 [shape = 'f32[2,24,16]{2,1,0:T(8,128)}', space=vmem, size = 0x6000, scoped, tag = 'scratch operand']
  #allocation3 [shape = 'f32[2,16,128]{2,1,0:T(8,128)}', space=vmem, size = 0x4000, scoped, tag = 'scratch operand']
  %s0 = inlined_call_operand.vmem [shape: f32[2,16,16], index: 0, kind: input, shape index: {}]
  %s1 = inlined_call_operand.vmem [shape: bf16[128,32], index: 1, kind: input, shape index: {}]
  %s2 = inlined_call_operand.vmem [shape: f32[1,32], index: 2, kind: input, shape index: {}]
  %s3 = inlined_call_operand.vmem [shape: f32[32,128], index: 3, kind: output, shape index: {}]
  %s4 = sld [smem:[#allocation0]]
  $region22: #{decoder_block.1} parent=0
    _
  %s6 = ssub.s32 1, %s4
  %s7 = scalar_select 0, %s6, %s4
  // Predicated region
  $region2: #{decoder_block.1} parent=0 // pred_check
    _
  $region3: #{decoder_block.1} parent=0 // pred_check_branch
    %9 = sbr.rel (0) target = $region5
  $region4: #{decoder_block.1} parent=0 // pred_region
    _
  $region5: #{decoder_block.1} parent=0 // pred_fallthru
    _
  // Predicated region
  $region6: #{decoder_block.1} parent=0 // pred_check
    _
  $region7: #{decoder_block.1} parent=0 // pred_check_branch
    %11 = sbr.rel (0) target = $region9
  $region8: #{decoder_block.1} parent=0 // pred_region
    _
  $region9: #{decoder_block.1} parent=0 // pred_fallthru
    _
  // Predicated region
  $region10: #{decoder_block.1} parent=0 // pred_check
    _
  $region11: #{decoder_block.1} parent=0 // pred_check_branch
    %13 = sbr.rel (0) target = $region13
  $region12: #{decoder_block.1} parent=0 // pred_region
    _
  $region13: #{decoder_block.1} parent=0 // pred_fallthru
    _
  %v15 = vld [vmem:[%s0] sm:$0xff]
  %v16 = vld [vmem:[%s0 + $0x8] sm:$0xff]
  %v17 = vld [vmem:[%s0 + $0x10] sm:$0xff]
  %v18 = vld [vmem:[%s0 + $0x18] sm:$0xff]
  %19 = vxpose.xlu0.b32.start [1/16] %v15, 128
  %20 = vxpose.xlu0.b32.cont [2/16] %v16, 128
  %21 = vxpose.xlu0.b32.cont [3/16] 0.0, 128
  %22 = vxpose.xlu0.b32.cont [4/16] 0.0, 128
  %23 = vxpose.xlu0.b32.cont [5/16] 0.0, 128
  %24 = vxpose.xlu0.b32.cont [6/16] 0.0, 128
  %25 = vxpose.xlu0.b32.cont [7/16] 0.0, 128
  %26 = vxpose.xlu0.b32.cont [8/16] 0.0, 128
  %27 = vxpose.xlu0.b32.cont [9/16] 0.0, 128
  %28 = vxpose.xlu0.b32.cont [10/16] 0.0, 128
  %29 = vxpose.xlu0.b32.cont [11/16] 0.0, 128
  %30 = vxpose.xlu0.b32.cont [12/16] 0.0, 128
  %31 = vxpose.xlu0.b32.cont [13/16] 0.0, 128
  %32 = vxpose.xlu0.b32.cont [14/16] 0.0, 128
  %33 = vxpose.xlu0.b32.cont [15/16] 0.0, 128
  %34 = vxpose.xlu0.b32.end [16/16] 0.0, 128
  %v35 = vpop.trf.xlu0
  %v36 = vpop.trf.xlu0
  %v37 = vpop.trf.xlu0
  %v38 = vpop.trf.xlu0
  %v39 = vpop.trf.xlu0
  %v40 = vpop.trf.xlu0
  %v41 = vpop.trf.xlu0
  %v42 = vpop.trf.xlu0
  %v43 = vpop.trf.xlu0
  %v44 = vpop.trf.xlu0
  %v45 = vpop.trf.xlu0
  %v46 = vpop.trf.xlu0
  %v47 = vpop.trf.xlu0
  %v48 = vpop.trf.xlu0
  %v49 = vpop.trf.xlu0
  %v50 = vpop.trf.xlu0
  %51 = vxpose.xlu0.b32.start [1/16] %v17, 128
  %52 = vxpose.xlu0.b32.cont [2/16] %v18, 128
  %53 = vxpose.xlu0.b32.cont [3/16] 0.0, 128
  %54 = vxpose.xlu0.b32.cont [4/16] 0.0, 128
  %55 = vxpose.xlu0.b32.cont [5/16] 0.0, 128
  %56 = vxpose.xlu0.b32.cont [6/16] 0.0, 128
  %57 = vxpose.xlu0.b32.cont [7/16] 0.0, 128
  %58 = vxpose.xlu0.b32.cont [8/16] 0.0, 128
  %59 = vxpose.xlu0.b32.cont [9/16] 0.0, 128
  %60 = vxpose.xlu0.b32.cont [10/16] 0.0, 128
  %61 = vxpose.xlu0.b32.cont [11/16] 0.0, 128
  %62 = vxpose.xlu0.b32.cont [12/16] 0.0, 128
  %63 = vxpose.xlu0.b32.cont [13/16] 0.0, 128
  %64 = vxpose.xlu0.b32.cont [14/16] 0.0, 128
  %65 = vxpose.xlu0.b32.cont [15/16] 0.0, 128
  %66 = vxpose.xlu0.b32.end [16/16] 0.0, 128
  %v67 = vpop.trf.xlu0
  %v68 = vpop.trf.xlu0
  %v69 = vpop.trf.xlu0
  %v70 = vpop.trf.xlu0
  %v71 = vpop.trf.xlu0
  %v72 = vpop.trf.xlu0
  %v73 = vpop.trf.xlu0
  %v74 = vpop.trf.xlu0
  %v75 = vpop.trf.xlu0
  %v76 = vpop.trf.xlu0
  %v77 = vpop.trf.xlu0
  %v78 = vpop.trf.xlu0
  %v79 = vpop.trf.xlu0
  %v80 = vpop.trf.xlu0
  %v81 = vpop.trf.xlu0
  %v82 = vpop.trf.xlu0
  %vm83 = vcmask 125952
  %84 = vst.msk [vmem:[#allocation2] sm:$0xf] %vm83, 0.0
  %85 = vst.msk [vmem:[#allocation2 + $0x18] sm:$0xf] %vm83, 0.0
  %86 = vst.msk [vmem:[#allocation2 + $0x14] sm:$0xf] %vm83, 0.0
  %87 = vst.msk [vmem:[#allocation2 + $0x2c] sm:$0xf] %vm83, 0.0
  %vm88 = vcmask 130048
  %89 = vst.msk [vmem:[#allocation2 + $0x4] sm:$0xff] %vm88, %v35
  %90 = vst.msk [vmem:[#allocation2 + $0xc] sm:$0xff] %vm88, %v36
  %91 = vst.msk [vmem:[#allocation2 + $0x1c] sm:$0xff] %vm88, %v67
  %92 = vst.msk [vmem:[#allocation2 + $0x24] sm:$0xff] %vm88, %v68
  %v93 = vld [vmem:[#allocation2] sm:$0xff]
  %v94 = vld [vmem:[#allocation2 + $0x8] sm:$0xff]
  %v95 = vld [vmem:[#allocation2 + $0x18] sm:$0xff]
  %v96 = vld [vmem:[#allocation2 + $0x20] sm:$0xff]
  %97 = vst.msk [vmem:[#allocation3] sm:$0xff] %vm88, %v93
  %98 = vst.msk [vmem:[#allocation3 + $0x8] sm:$0xff] %vm88, %v94
  %99 = vst.msk [vmem:[#allocation3 + $0x10] sm:$0xff] %vm88, %v95
  %100 = vst.msk [vmem:[#allocation3 + $0x18] sm:$0xff] %vm88, %v96
  %v101 = vld [vmem:[#allocation2 + $0x1] sm:$0xff]
  %v102 = vld [vmem:[#allocation2 + $0x9] sm:$0xff]
  %v103 = vld [vmem:[#allocation2 + $0x19] sm:$0xff]
  %v104 = vld [vmem:[#allocation2 + $0x21] sm:$0xff]
  %109 = vrot.lane.b32.xlu0 %v101, 16
  %v110 = vpop.permute.xlu0 %109
  %111 = vrot.lane.b32.xlu0 %v102, 16
  %v112 = vpop.permute.xlu0 %111
  %113 = vrot.lane.b32.xlu0 %v103, 16
  %v114 = vpop.permute.xlu0 %113
  %115 = vrot.lane.b32.xlu0 %v104, 16
  %v116 = vpop.permute.xlu0 %115
  %vm121 = vcmask 261248
  %122 = vst.msk [vmem:[#allocation3] sm:$0xff] %vm121, %v110
  %123 = vst.msk [vmem:[#allocation3 + $0x8] sm:$0xff] %vm121, %v112
  %124 = vst.msk [vmem:[#allocation3 + $0x10] sm:$0xff] %vm121, %v114
  %125 = vst.msk [vmem:[#allocation3 + $0x18] sm:$0xff] %vm121, %v116
  %v126 = vld [vmem:[#allocation2 + $0x2] sm:$0xff]
  %v127 = vld [vmem:[#allocation2 + $0xa] sm:$0xff]
  %v128 = vld [vmem:[#allocation2 + $0x1a] sm:$0xff]
  %v129 = vld [vmem:[#allocation2 + $0x22] sm:$0xff]
  %134 = vrot.lane.b32.xlu0 %v126, 32
  %v135 = vpop.permute.xlu0 %134
  %136 = vrot.lane.b32.xlu0 %v127, 32
  %v137 = vpop.permute.xlu0 %136
  %138 = vrot.lane.b32.xlu0 %v128, 32
  %v139 = vpop.permute.xlu0 %138
  %140 = vrot.lane.b32.xlu0 %v129, 32
  %v141 = vpop.permute.xlu0 %140
  %vm146 = vcmask 392448
  %147 = vst.msk [vmem:[#allocation3] sm:$0xff] %vm146, %v135
  %148 = vst.msk [vmem:[#allocation3 + $0x8] sm:$0xff] %vm146, %v137
  %149 = vst.msk [vmem:[#allocation3 + $0x10] sm:$0xff] %vm146, %v139
  %150 = vst.msk [vmem:[#allocation3 + $0x18] sm:$0xff] %vm146, %v141
  %v151 = vld [vmem:[#allocation2 + $0x3] sm:$0xff]
  %v152 = vld [vmem:[#allocation2 + $0xb] sm:$0xff]
  %v153 = vld [vmem:[#allocation2 + $0x1b] sm:$0xff]
  %v154 = vld [vmem:[#allocation2 + $0x23] sm:$0xff]
  %159 = vrot.lane.b32.xlu0 %v151, 48
  %v160 = vpop.permute.xlu0 %159
  %161 = vrot.lane.b32.xlu0 %v152, 48
  %v162 = vpop.permute.xlu0 %161
  %163 = vrot.lane.b32.xlu0 %v153, 48
  %v164 = vpop.permute.xlu0 %163
  %165 = vrot.lane.b32.xlu0 %v154, 48
  %v166 = vpop.permute.xlu0 %165
  %vm171 = vcmask 523648
  %172 = vst.msk [vmem:[#allocation3] sm:$0xff] %vm171, %v160
  %173 = vst.msk [vmem:[#allocation3 + $0x8] sm:$0xff] %vm171, %v162
  %174 = vst.msk [vmem:[#allocation3 + $0x10] sm:$0xff] %vm171, %v164
  %175 = vst.msk [vmem:[#allocation3 + $0x18] sm:$0xff] %vm171, %v166
  %v176 = vld [vmem:[#allocation2 + $0x4] sm:$0xff]
  %v177 = vld [vmem:[#allocation2 + $0xc] sm:$0xff]
  %v178 = vld [vmem:[#allocation2 + $0x1c] sm:$0xff]
  %v179 = vld [vmem:[#allocation2 + $0x24] sm:$0xff]
  %184 = vrot.lane.b32.xlu0 %v176, 64
  %v185 = vpop.permute.xlu0 %184
  %186 = vrot.lane.b32.xlu0 %v177, 64
  %v187 = vpop.permute.xlu0 %186
  %188 = vrot.lane.b32.xlu0 %v178, 64
  %v189 = vpop.permute.xlu0 %188
  %190 = vrot.lane.b32.xlu0 %v179, 64
  %v191 = vpop.permute.xlu0 %190
  %vm196 = vcmask 654848
  %197 = vst.msk [vmem:[#allocation3] sm:$0xff] %vm196, %v185
  %198 = vst.msk [vmem:[#allocation3 + $0x8] sm:$0xff] %vm196, %v187
  %199 = vst.msk [vmem:[#allocation3 + $0x10] sm:$0xff] %vm196, %v189
  %200 = vst.msk [vmem:[#allocation3 + $0x18] sm:$0xff] %vm196, %v191
  %v201 = vld [vmem:[#allocation2 + $0x5] sm:$0xff]
  %v202 = vld [vmem:[#allocation2 + $0xd] sm:$0xff]
  %v203 = vld [vmem:[#allocation2 + $0x1d] sm:$0xff]
  %v204 = vld [vmem:[#allocation2 + $0x25] sm:$0xff]
  %209 = vrot.lane.b32.xlu0 %v201, 80
  %v210 = vpop.permute.xlu0 %209
  %211 = vrot.lane.b32.xlu0 %v202, 80
  %v212 = vpop.permute.xlu0 %211
  %213 = vrot.lane.b32.xlu0 %v203, 80
  %v214 = vpop.permute.xlu0 %213
  %215 = vrot.lane.b32.xlu0 %v204, 80
  %v216 = vpop.permute.xlu0 %215
  %vm221 = vcmask 786048
  %222 = vst.msk [vmem:[#allocation3] sm:$0xff] %vm221, %v210
  %223 = vst.msk [vmem:[#allocation3 + $0x8] sm:$0xff] %vm221, %v212
  %224 = vst.msk [vmem:[#allocation3 + $0x10] sm:$0xff] %vm221, %v214
  %225 = vst.msk [vmem:[#allocation3 + $0x18] sm:$0xff] %vm221, %v216
  %v226 = vld [vmem:[#allocation2 + $0x6] sm:$0xff]
  %v227 = vld [vmem:[#allocation2 + $0xe] sm:$0xff]
  %v228 = vld [vmem:[#allocation2 + $0x1e] sm:$0xff]
  %v229 = vld [vmem:[#allocation2 + $0x26] sm:$0xff]
  %234 = vrot.lane.b32.xlu0 %v226, 96
  %v235 = vpop.permute.xlu0 %234
  %236 = vrot.lane.b32.xlu0 %v227, 96
  %v237 = vpop.permute.xlu0 %236
  %238 = vrot.lane.b32.xlu0 %v228, 96
  %v239 = vpop.permute.xlu0 %238
  %240 = vrot.lane.b32.xlu0 %v229, 96
  %v241 = vpop.permute.xlu0 %240
  %vm246 = vcmask 917248
  %247 = vst.msk [vmem:[#allocation3] sm:$0xff] %vm246, %v235
  %248 = vst.msk [vmem:[#allocation3 + $0x8] sm:$0xff] %vm246, %v237
  %249 = vst.msk [vmem:[#allocation3 + $0x10] sm:$0xff] %vm246, %v239
  %250 = vst.msk [vmem:[#allocation3 + $0x18] sm:$0xff] %vm246, %v241
  %v251 = vld [vmem:[#allocation2 + $0x7] sm:$0xff]
  %v252 = vld [vmem:[#allocation2 + $0xf] sm:$0xff]
  %v253 = vld [vmem:[#allocation2 + $0x1f] sm:$0xff]
  %v254 = vld [vmem:[#allocation2 + $0x27] sm:$0xff]
  %259 = vrot.lane.b32.xlu0 %v251, 112
  %v260 = vpop.permute.xlu0 %259
  %261 = vrot.lane.b32.xlu0 %v252, 112
  %v262 = vpop.permute.xlu0 %261
  %263 = vrot.lane.b32.xlu0 %v253, 112
  %v264 = vpop.permute.xlu0 %263
  %265 = vrot.lane.b32.xlu0 %v254, 112
  %v266 = vpop.permute.xlu0 %265
  %vm271 = vcmask 1048448
  %272 = vst.msk [vmem:[#allocation3] sm:$0xff] %vm271, %v260
  %273 = vst.msk [vmem:[#allocation3 + $0x8] sm:$0xff] %vm271, %v262
  %274 = vst.msk [vmem:[#allocation3 + $0x10] sm:$0xff] %vm271, %v264
  %275 = vst.msk [vmem:[#allocation3 + $0x18] sm:$0xff] %vm271, %v266
  %v276 = vld [vmem:[#allocation3] sm:$0xff]
  %v277 = vld [vmem:[#allocation3 + $0x8] sm:$0xff]
  %v278 = vld [vmem:[#allocation3 + $0x10] sm:$0xff]
  %v279 = vld [vmem:[#allocation3 + $0x18] sm:$0xff]
  %v280 = vpack.c.bf16 %v277, %v276
  %v281 = vpack.c.bf16 %v279, %v278
  %v282 = vld [vmem:[%s1] sm:$0xf]
  %v283 = vld [vmem:[%s1 + $0x4] sm:$0xf]
  %v284 = vld [vmem:[%s1 + $0x8] sm:$0xf]
  %v285 = vld [vmem:[%s1 + $0xc] sm:$0xf]
  %v286 = vld [vmem:[%s1 + $0x10] sm:$0xf]
  %v287 = vld [vmem:[%s1 + $0x14] sm:$0xf]
  %v288 = vld [vmem:[%s1 + $0x18] sm:$0xf]
  %v289 = vld [vmem:[%s1 + $0x1c] sm:$0xf]
  %v290 = vld [vmem:[%s1 + $0x20] sm:$0xf]
  %v291 = vld [vmem:[%s1 + $0x24] sm:$0xf]
  %v292 = vld [vmem:[%s1 + $0x28] sm:$0xf]
  %v293 = vld [vmem:[%s1 + $0x2c] sm:$0xf]
  %v294 = vld [vmem:[%s1 + $0x30] sm:$0xf]
  %v295 = vld [vmem:[%s1 + $0x34] sm:$0xf]
  %v296 = vld [vmem:[%s1 + $0x38] sm:$0xf]
  %v297 = vld [vmem:[%s1 + $0x3c] sm:$0xf]
  %v298 = vld [vmem:[%s2] sm:$0x1]
  %v300 = vlaneseq
  %v301 = vshrl.u32 %v300, 7
  %v302 = vsub.s32 0, %v301
  %v303 = vrot.slane %v298, %v302
  %v321 = vunpack.c.l.b16 %v282
  %v322 = vunpack.c.l.b16 %v283
  %v323 = vunpack.c.l.b16 %v284
  %v324 = vunpack.c.l.b16 %v285
  %v325 = vunpack.c.l.b16 %v286
  %v326 = vunpack.c.l.b16 %v287
  %v327 = vunpack.c.l.b16 %v288
  %v328 = vunpack.c.l.b16 %v289
  %v329 = vunpack.c.l.b16 %v290
  %v330 = vunpack.c.l.b16 %v291
  %v331 = vunpack.c.l.b16 %v292
  %v332 = vunpack.c.l.b16 %v293
  %v333 = vunpack.c.l.b16 %v294
  %v334 = vunpack.c.l.b16 %v295
  %v335 = vunpack.c.l.b16 %v296
  %v336 = vunpack.c.l.b16 %v297
  %v337 = vpack.c.b16 %v322, %v321
  %v338 = vpack.c.b16 %v324, %v323
  %v339 = vpack.c.b16 %v326, %v325
  %v340 = vpack.c.b16 %v328, %v327
  %v341 = vpack.c.b16 %v330, %v329
  %v342 = vpack.c.b16 %v332, %v331
  %v343 = vpack.c.b16 %v334, %v333
  %v344 = vpack.c.b16 %v336, %v335
  %353 = vmatprep.subr.bf16.mxu0 0
  %354 = vmatpush1.bf16.msra.mxu0 %v344
  %355 = vmatprep.subr.bf16.mxu0 0
  %356 = vmatpush1.bf16.msra.mxu0 %v343
  %357 = vmatprep.subr.bf16.mxu0 0
  %358 = vmatpush1.bf16.msra.mxu0 %v342
  %359 = vmatprep.subr.bf16.mxu0 0
  %360 = vmatpush1.bf16.msra.mxu0 %v341
  %361 = vmatprep.subr.bf16.mxu0 0
  %362 = vmatpush1.bf16.msra.mxu0 %v340
  %363 = vmatprep.subr.bf16.mxu0 0
  %364 = vmatpush1.bf16.msra.mxu0 %v339
  %365 = vmatprep.subr.bf16.mxu0 0
  %366 = vmatpush1.bf16.msra.mxu0 %v338
  %367 = vmatprep.subr.bf16.mxu0 0
  %368 = vmatpush1.bf16.msra.mxu0 %v337
  %369 = vmatprep.subr.bf16.mxu0 0
  %370 = vmatpush2.bf16.msra.mxu0 0
  %371 = vmatprep.subr.bf16.mxu0 0
  %372 = vmatpush2.bf16.msra.mxu0 0
  %373 = vmatprep.subr.bf16.mxu0 0
  %374 = vmatpush2.bf16.msra.mxu0 0
  %375 = vmatprep.subr.bf16.mxu0 0
  %376 = vmatpush2.bf16.msra.mxu0 0
  %377 = vmatprep.subr.bf16.mxu0 0
  %378 = vmatpush2.bf16.msra.mxu0 0
  %379 = vmatprep.subr.bf16.mxu0 0
  %380 = vmatpush2.bf16.msra.mxu0 0
  %381 = vmatprep.subr.bf16.mxu0 0
  %382 = vmatpush2.bf16.msra.mxu0 0
  %383 = vmatprep.subr.bf16.mxu0 0
  %384 = vmatpush2.bf16.msra.mxu0 0
  %385 = vmatprep.mubr.bf16.mxu0 0
  %386 = vmatmul.mubr.bf16.gmra.mxu0 %v280
  %v387 = vpop.f32.mrf.mxu0
  %v388 = vadd.f32 %v303, %v387
  %v389 = vpop.f32.mrf.mxu0
  %v390 = vpop.f32.mrf.mxu0
  %v391 = vadd.f32 %v303, %v390
  %v392 = vpop.f32.mrf.mxu0
  %393 = vmatprep.mubr.bf16.mxu0 0
  %394 = vmatmul.mubr.bf16.gmra.mxu0 %v281
  %v395 = vpop.f32.mrf.mxu0
  %v396 = vadd.f32 %v303, %v395
  %v397 = vpop.f32.mrf.mxu0
  %v398 = vpop.f32.mrf.mxu0
  %v399 = vadd.f32 %v303, %v398
  %v400 = vpop.f32.mrf.mxu0
  %401 = vdwg.mxu0
  %v402 = vmax.f32 %v388, 0.0
  %v403 = vmax.f32 %v391, 0.0
  %v404 = vmax.f32 %v396, 0.0
  %v405 = vmax.f32 %v399, 0.0
  %410 = vrot.lane.b32.xlu0 %v402, 32
  %v411 = vpop.permute.xlu0 %410
  %412 = vrot.lane.b32.xlu0 %v403, 32
  %v413 = vpop.permute.xlu0 %412
  %414 = vrot.lane.b32.xlu0 %v404, 32
  %v415 = vpop.permute.xlu0 %414
  %416 = vrot.lane.b32.xlu0 %v405, 32
  %v417 = vpop.permute.xlu0 %416
  %422 = vrot.lane.b32.xlu0 %v402, 64
  %v423 = vpop.permute.xlu0 %422
  %424 = vrot.lane.b32.xlu0 %v403, 64
  %v425 = vpop.permute.xlu0 %424
  %426 = vrot.lane.b32.xlu0 %v404, 64
  %v427 = vpop.permute.xlu0 %426
  %428 = vrot.lane.b32.xlu0 %v405, 64
  %v429 = vpop.permute.xlu0 %428
  %434 = vrot.lane.b32.xlu0 %v402, 96
  %v435 = vpop.permute.xlu0 %434
  %436 = vrot.lane.b32.xlu0 %v403, 96
  %v437 = vpop.permute.xlu0 %436
  %438 = vrot.lane.b32.xlu0 %v404, 96
  %v439 = vpop.permute.xlu0 %438
  %440 = vrot.lane.b32.xlu0 %v405, 96
  %v441 = vpop.permute.xlu0 %440
  %vm446 = vcmask 261120
  %v447 = vsel %vm446, %v402, %v411
  %v448 = vsel %vm446, %v403, %v413
  %v449 = vsel %vm446, %v404, %v415
  %v450 = vsel %vm446, %v405, %v417
  %vm451 = vcmask 523264
  %v452 = vsel %vm451, %v447, %v423
  %v453 = vsel %vm451, %v448, %v425
  %v454 = vsel %vm451, %v449, %v427
  %v455 = vsel %vm451, %v450, %v429
  %vm456 = vcmask 785408
  %v457 = vsel %vm456, %v452, %v435
  %v458 = vsel %vm456, %v453, %v437
  %v459 = vsel %vm456, %v454, %v439
  %v460 = vsel %vm456, %v455, %v441
  %461 = vst [vmem:[%s3] sm:$0xff] %v457
  %462 = vst [vmem:[%s3 + $0x8] sm:$0xff] %v458
  %463 = vst [vmem:[%s3 + $0x10] sm:$0xff] %v459
  %464 = vst [vmem:[%s3 + $0x18] sm:$0xff] %v460
  // Predicated region
  $region14: #{decoder_block.1} parent=0 // pred_check
    _
  $region15: #{decoder_block.1} parent=0 // pred_check_branch
    %466 = sbr.rel (0) target = $region17
  $region16: #{decoder_block.1} parent=0 // pred_region
    _
  $region17: #{decoder_block.1} parent=0 // pred_fallthru
    _
  // Predicated region
  $region18: #{decoder_block.1} parent=0 // pred_check
    _
  $region19: #{decoder_block.1} parent=0 // pred_check_branch
    %468 = sbr.rel (0) target = $region21
  $region20: #{decoder_block.1} parent=0 // pred_region
    _
  $region21: #{decoder_block.1} parent=0 // pred_fallthru
    _

</llo_original>
